<compile_context>
chip_gen: v6e
topology: v6e:2x2x1
jax: 0.10.0
libtpu: 0.0.40
codegen_flags: <defaults>
</compile_context>

<pallas_src>
import jax
import jax.numpy as jnp
from jax.experimental import pallas as pl
from jax.experimental.pallas import tpu as pltpu

NUM_STATE = 3          # Pendulum-v0 observation_space.shape[0]
H1, H2, OUT = 64, 8, 1
NEG_SLOPE = 0.01       # F.leaky_relu default

# Max batch-tile (lanes). h1 = (64, TB) f32 is 2 MiB at TB=8192; with the
# double-buffered x/out tiles this stays well under every generation's scoped
# VMEM budget while amortizing the ~0.35 us per-grid-step pipeline overhead.
_TB_MAX = 8192


def _leaky_relu(x, slope=NEG_SLOPE):
    # max(x, a*x) == leaky_relu(x) for 0 < a < 1 (mul+max: 2 VPU ops, not 3).
    return jnp.maximum(x, slope * x)


def critic_kernel(x_ref, w1_ref, b1_ref, w2_ref, b2_ref, w3_ref, b3_ref, o_ref):
    # x_ref: (NUM_STATE, TB) -- batch on the lane axis, lane-dense throughout.
    x = x_ref[...]

    # fc1 (3 -> 64) on the MXU. K=3 utilization is poor, but the MXU is idle
    # slack here and this removes ~2/3 of the kernel's VALU work.
    h1 = jnp.dot(w1_ref[...], x, preferred_element_type=jnp.float32) + b1_ref[...]
    h1 = _leaky_relu(h1)                              # (H1, TB)

    # fc2 (64 -> 8) on the MXU, lane-dense N = TB.
    h2 = jnp.dot(w2_ref[...], h1, preferred_element_type=jnp.float32) + b2_ref[...]
    h2 = _leaky_relu(h2)                              # (H2, TB)

    # head (8 -> 1): VPU multiply + sublane (XLU) reduce instead of an N=1 matmul.
    v = jnp.sum(w3_ref[...] * h2, axis=0, keepdims=True) + b3_ref[...]   # (1, TB)

    o_ref[...] = v.astype(o_ref.dtype)                # lane-dense (1, TB) store


def _choose_batch_tile(B):
    """Balanced batch tile: multiple of 128, capped at _TB_MAX, >=2 grid steps
    whenever B > 128 (so v7x's two TensorCores both get work)."""
    b128 = int(max(128, pl.cdiv(B, 128) * 128))       # batch rounded up to lanes
    min_tiles = 2 if b128 >= 256 else 1
    n_tiles = max(min_tiles, pl.cdiv(b128, _TB_MAX))
    return int(pl.cdiv(b128 // 128, n_tiles) * 128)


def critic_forward_t(x_t, params):
    """Transposed API: x_t (NUM_STATE, B) -> (OUT, B). Zero wrapper relayouts."""
    w1, b1, w2, b2, w3, b3 = params
    B = x_t.shape[1]

    TB = _choose_batch_tile(B)
    grid = (int(pl.cdiv(B, TB)),)

    flops = 2 * B * (NUM_STATE * H1 + H1 * H2 + H2 * OUT)
    bytes_accessed = 4 * (B * NUM_STATE + B * OUT
                          + NUM_STATE * H1 + H1 + H1 * H2 + H2 + H2 * OUT + OUT)

    full = lambda a: pl.BlockSpec(a.shape, lambda i: (0,) * a.ndim)

    return pl.pallas_call(
        critic_kernel,
        out_shape=jax.ShapeDtypeStruct((OUT, B), jnp.float32),
        grid=grid,
        in_specs=[
            pl.BlockSpec((NUM_STATE, TB), lambda i: (0, i)),   # pipelined x tile
            full(w1), full(b1),                                # weights VMEM-resident
            full(w2), full(b2),
            full(w3), full(b3),
        ],
        out_specs=pl.BlockSpec((OUT, TB), lambda i: (0, i)),   # lane-dense out tile
        compiler_params=pltpu.CompilerParams(
            dimension_semantics=("parallel",),                 # megacore on v7x
            vmem_limit_bytes=32 * 1024 * 1024),                # safe on v5e/v6e/v7x
        cost_estimate=pl.CostEstimate(
            flops=flops, transcendentals=0, bytes_accessed=bytes_accessed),
    )(x_t, w1, b1, w2, b2, w3, b3)


def critic_forward(x, params):
    """PyTorch-matching API: x (B, NUM_STATE) float32 -> (B, 1) float32.

    The x.T / (1,B)->(B,1) reshape below are small XLA relayout ops kept only
    to match the reference signature; callers that can keep the batch on the
    last axis should call critic_forward_t directly and skip both.
    """
    B = x.shape[0]
    return critic_forward_t(x.T, params).reshape(B, OUT)
    # TODO(synk): optional bf16 activation path (v6e/v7x) behind a flag to halve
    # VALU work and x HBM bytes; kept f32 to match the PyTorch reference exactly.


def init_params(key):
    """Deterministic init mimicking torch.nn.Linear default U(-1/sqrt(fan_in), +).

    Weights are stored torch-style (out, in); biases as (out, 1); the head
    weight is stored as (H2, OUT) so the kernel's sublane reduction needs no
    reshape.
    """
    def linear(k, fan_in, fan_out):
        kw, kb = jax.random.split(k)
        bound = 1.0 / jnp.sqrt(float(fan_in))
        w = jax.random.uniform(kw, (fan_out, fan_in), jnp.float32, -bound, bound)
        b = jax.random.uniform(kb, (fan_out, 1), jnp.float32, -bound, bound)
        return w, b

    k1, k2, k3 = jax.random.split(key, 3)
    w1, b1 = linear(k1, NUM_STATE, H1)     # (64, 3), (64, 1)
    w2, b2 = linear(k2, H1, H2)            # (8, 64), (8, 1)
    w3t, b3 = linear(k3, H2, OUT)          # (1, 8), (1, 1)
    w3 = w3t.T                             # (8, 1)
    return (w1, b1, w2, b2, w3, b3)


def critic_reference(x, params):
    w1, b1, w2, b2, w3, b3 = params
    lrelu = lambda t: jnp.where(t >= 0, t, NEG_SLOPE * t)
    h1 = lrelu(x @ w1.T + b1.T)
    h2 = lrelu(h1 @ w2.T + b2.T)
    return h2 @ w3 + b3.T


if __name__ == "__main__":
    key = jax.random.PRNGKey(0)
    kx, kx2, kp = jax.random.split(key, 3)
    params = init_params(kp)

    # Small-batch check (single 128-lane tile, masked tail).
    B = 8
    x = jax.random.normal(kx, (B, NUM_STATE), jnp.float32)
    value = jax.block_until_ready(critic_forward(x, params))
    ref = critic_reference(x, params)
    assert value.shape == (B, 1), value.shape
    assert jnp.allclose(value, ref, atol=1e-4, rtol=1e-4), (value, ref)

    # Multi-tile check: B=2500 -> two BALANCED tiles of 1280 lanes (grid=2),
    # second tile partially padded, exercising the v7x-friendly >=2-step path.
    B2 = 2500
    x2 = jax.random.normal(kx2, (B2, NUM_STATE), jnp.float32)
    value2 = jax.block_until_ready(critic_forward(x2, params))
    ref2 = critic_reference(x2, params)
    assert value2.shape == (B2, 1), value2.shape
    assert jnp.allclose(value2, ref2, atol=1e-4, rtol=1e-4)

    print("KERNEL_OK")
</pallas_src>

<mosaic_0001>
module attributes {stable_mosaic.version = 11 : i64} {
  func.func @critic_kernel(%arg0: i32, %arg1: memref<3x128xf32, #tpu.memory_space<vmem>>, %arg2: memref<64x3xf32, #tpu.memory_space<vmem>>, %arg3: memref<64x1xf32, #tpu.memory_space<vmem>>, %arg4: memref<8x64xf32, #tpu.memory_space<vmem>>, %arg5: memref<8x1xf32, #tpu.memory_space<vmem>>, %arg6: memref<8x1xf32, #tpu.memory_space<vmem>>, %arg7: memref<1x1xf32, #tpu.memory_space<vmem>>, %arg8: memref<1x128xf32, #tpu.memory_space<vmem>>) attributes {dimension_semantics = [#tpu.dimension_semantics<parallel>], iteration_bounds = array<i64: 1>, scalar_prefetch = 0 : i64, scratch_operands = 0 : i64, tpu.core_type = #tpu.core_type<tc>, window_params = [{transform_indices = @transform_0, window_bounds = array<i64: 3, 128>}, {pipeline_mode = #tpu.pipeline_mode<synchronous>, transform_indices = @transform_1, window_bounds = array<i64: 64, 3>}, {pipeline_mode = #tpu.pipeline_mode<synchronous>, transform_indices = @transform_2, window_bounds = array<i64: 64, 1>}, {pipeline_mode = #tpu.pipeline_mode<synchronous>, transform_indices = @transform_3, window_bounds = array<i64: 8, 64>}, {pipeline_mode = #tpu.pipeline_mode<synchronous>, transform_indices = @transform_4, window_bounds = array<i64: 8, 1>}, {pipeline_mode = #tpu.pipeline_mode<synchronous>, transform_indices = @transform_5, window_bounds = array<i64: 8, 1>}, {pipeline_mode = #tpu.pipeline_mode<synchronous>, transform_indices = @transform_6, window_bounds = array<i64: 1, 1>}, {transform_indices = @transform_7, window_bounds = array<i64: 1, 128>}]} {
    %c0 = arith.constant 0 : index
    %c0_0 = arith.constant 0 : index
    %0 = vector.load %arg1[%c0, %c0_0] : memref<3x128xf32, #tpu.memory_space<vmem>>, vector<3x128xf32>
    %c0_1 = arith.constant 0 : index
    %c0_2 = arith.constant 0 : index
    %1 = vector.load %arg2[%c0_1, %c0_2] : memref<64x3xf32, #tpu.memory_space<vmem>>, vector<64x3xf32>
    %cst = arith.constant dense<0.000000e+00> : vector<64x128xf32>
    %2 = tpu.matmul %1, %0, %cst {dimension_numbers = #tpu.dot_dimension_numbers<[1], [0], [0], [1], [0, 0, 1, 1], [], []>} : vector<64x3xf32>, vector<3x128xf32>, vector<64x128xf32> -> vector<64x128xf32>
    %c0_3 = arith.constant 0 : index
    %c0_4 = arith.constant 0 : index
    %3 = vector.load %arg3[%c0_3, %c0_4] : memref<64x1xf32, #tpu.memory_space<vmem>>, vector<64x1xf32>
    %4 = vector.broadcast %3 : vector<64x1xf32> to vector<64x128xf32>
    %5 = arith.addf %2, %4 : vector<64x128xf32>
    %cst_5 = arith.constant 0.00999999977 : f32
    %6 = vector.broadcast %cst_5 : f32 to vector<64x128xf32>
    %7 = arith.mulf %6, %5 : vector<64x128xf32>
    %8 = arith.maximumf %5, %7 : vector<64x128xf32>
    %c0_6 = arith.constant 0 : index
    %c0_7 = arith.constant 0 : index
    %9 = vector.load %arg4[%c0_6, %c0_7] : memref<8x64xf32, #tpu.memory_space<vmem>>, vector<8x64xf32>
    %cst_8 = arith.constant dense<0.000000e+00> : vector<8x128xf32>
    %10 = tpu.matmul %9, %8, %cst_8 {dimension_numbers = #tpu.dot_dimension_numbers<[1], [0], [0], [1], [0, 0, 1, 1], [], []>} : vector<8x64xf32>, vector<64x128xf32>, vector<8x128xf32> -> vector<8x128xf32>
    %c0_9 = arith.constant 0 : index
    %c0_10 = arith.constant 0 : index
    %11 = vector.load %arg5[%c0_9, %c0_10] : memref<8x1xf32, #tpu.memory_space<vmem>>, vector<8x1xf32>
    %12 = vector.broadcast %11 : vector<8x1xf32> to vector<8x128xf32>
    %13 = arith.addf %10, %12 : vector<8x128xf32>
    %cst_11 = arith.constant 0.00999999977 : f32
    %14 = vector.broadcast %cst_11 : f32 to vector<8x128xf32>
    %15 = arith.mulf %14, %13 : vector<8x128xf32>
    %16 = arith.maximumf %13, %15 : vector<8x128xf32>
    %c0_12 = arith.constant 0 : index
    %c0_13 = arith.constant 0 : index
    %17 = vector.load %arg6[%c0_12, %c0_13] : memref<8x1xf32, #tpu.memory_space<vmem>>, vector<8x1xf32>
    %18 = vector.broadcast %17 : vector<8x1xf32> to vector<8x128xf32>
    %19 = arith.mulf %18, %16 : vector<8x128xf32>
    %cst_14 = arith.constant dense<0.000000e+00> : vector<128xf32>
    %20 = vector.multi_reduction <add>, %19, %cst_14 [0] : vector<8x128xf32> to vector<128xf32>
    %21 = vector.shape_cast %20 : vector<128xf32> to vector<1x128xf32>
    %c0_15 = arith.constant 0 : index
    %c0_16 = arith.constant 0 : index
    %22 = vector.load %arg7[%c0_15, %c0_16] : memref<1x1xf32, #tpu.memory_space<vmem>>, vector<1x1xf32>
    %23 = vector.broadcast %22 : vector<1x1xf32> to vector<1x128xf32>
    %24 = arith.addf %21, %23 : vector<1x128xf32>
    %c0_17 = arith.constant 0 : index
    %c0_18 = arith.constant 0 : index
    %25 = vector.load %arg8[%c0_17, %c0_18] : memref<1x128xf32, #tpu.memory_space<vmem>>, vector<1x128xf32>
    tpu.vector_store %arg8[%c0_17, %c0_18], %24 {strides = array<i32>} : memref<1x128xf32, #tpu.memory_space<vmem>>, vector<1x128xf32>,
    return
  }
  func.func @transform_0(%arg0: i32) -> (i32, i32) {
    %c0_i32 = arith.constant 0 : i32
    %c0_i32_0 = arith.constant 0 : i32
    return %c0_i32, %arg0 : i32, i32
  }
  func.func @transform_1(%arg0: i32) -> (i32, i32) {
    %c0_i32 = arith.constant 0 : i32
    %c0_i32_0 = arith.constant 0 : i32
    %c0_i32_1 = arith.constant 0 : i32
    return %c0_i32, %c0_i32_0 : i32, i32
  }
  func.func @transform_2(%arg0: i32) -> (i32, i32) {
    %c0_i32 = arith.constant 0 : i32
    %c0_i32_0 = arith.constant 0 : i32
    %c0_i32_1 = arith.constant 0 : i32
    return %c0_i32, %c0_i32_0 : i32, i32
  }
  func.func @transform_3(%arg0: i32) -> (i32, i32) {
    %c0_i32 = arith.constant 0 : i32
    %c0_i32_0 = arith.constant 0 : i32
    %c0_i32_1 = arith.constant 0 : i32
    return %c0_i32, %c0_i32_0 : i32, i32
  }
  func.func @transform_4(%arg0: i32) -> (i32, i32) {
    %c0_i32 = arith.constant 0 : i32
    %c0_i32_0 = arith.constant 0 : i32
    %c0_i32_1 = arith.constant 0 : i32
    return %c0_i32, %c0_i32_0 : i32, i32
  }
  func.func @transform_5(%arg0: i32) -> (i32, i32) {
    %c0_i32 = arith.constant 0 : i32
    %c0_i32_0 = arith.constant 0 : i32
    %c0_i32_1 = arith.constant 0 : i32
    return %c0_i32, %c0_i32_0 : i32, i32
  }
  func.func @transform_6(%arg0: i32) -> (i32, i32) {
    %c0_i32 = arith.constant 0 : i32
    %c0_i32_0 = arith.constant 0 : i32
    %c0_i32_1 = arith.constant 0 : i32
    return %c0_i32, %c0_i32_0 : i32, i32
  }
  func.func @transform_7(%arg0: i32) -> (i32, i32) {
    %c0_i32 = arith.constant 0 : i32
    %c0_i32_0 = arith.constant 0 : i32
    return %c0_i32, %arg0 : i32, i32
  }
}

</mosaic_0001>

<llo_original>
// kernel: tpu_custom_call.1
$region0: #{tpu_custom_call.1}
  #allocation0 [shape = 'u32[]', space=smem, size = 0x4, offset = 0x4, fixed_abs, tag = 'smem constant byte address 0x4 - core index']
  #allocation1 [shape = 'u32[144,128]{1,0:T(1,128)}', space=vmem, size = 0x12000, scoped, tag = 'internal scratch']
  #allocation2 [shape = 'f32[1,1]{1,0:T(1,128)S(1)}', space=vmem, size = 0x200, scoped, tag = 'scoped memory for tpu_custom_call.1']
  %s0 = inlined_call_operand.vmem [shape: f32[3,8], index: 0, kind: input, shape index: {}]
  %s1 = inlined_call_operand.vmem [shape: f32[64,3], index: 1, kind: input, shape index: {}]
  %s2 = inlined_call_operand.vmem [shape: f32[64,1], index: 2, kind: input, shape index: {}]
  %s3 = inlined_call_operand.vmem [shape: f32[8,64], index: 3, kind: input, shape index: {}]
  %s4 = inlined_call_operand.vmem [shape: f32[8,1], index: 4, kind: input, shape index: {}]
  %s5 = inlined_call_operand.vmem [shape: f32[8,1], index: 5, kind: input, shape index: {}]
  %s6 = inlined_call_operand.<no memory space> [shape: f32[1,1], index: 6, kind: input, shape index: {}]
  %s7 = inlined_call_operand.hbm [shape: f32[1,8], index: 7, kind: output, shape index: {}]
  %s8 = sld [smem:[#allocation0]]
  $region38: #{tpu_custom_call.1} parent=0
    _
  %s10 = ssub.s32 1, %s8
  %s11 = scalar_select 0, %s10, %s8
  %v12 = vstv %s6
  %13 = vst [vmem:[#allocation2] sm:$0x1] %v12
  $region1: #{tpu_custom_call.1} parent=0
    #allocation3 [shape = 'u8[512]{0}', space=vmem, size = 0x400, scoped, tag = 'output window, operand 0, single buffered']
    #allocation4 [shape = 's32[1]{0}', space=sflag, size = 0x4, scoped, tag = 'scoped memory for tpu_custom_call.1']
    %14 = vsyncpa [#allocation4], 0
    // Predicated region
    $region2: #{tpu_custom_call.1} parent=1 // pred_check
      _
    $region3: #{tpu_custom_call.1} parent=1 // pred_check_branch
      %16 = sbr.rel (0) target = $region5
    $region4: #{tpu_custom_call.1} parent=1 // pred_region
      _
    $region5: #{tpu_custom_call.1} parent=1 // pred_fallthru
      _
    // Predicated region
    $region6: #{tpu_custom_call.1} parent=1 // pred_check
      _
    $region7: #{tpu_custom_call.1} parent=1 // pred_check_branch
      %18 = sbr.rel (0) target = $region9
    $region8: #{tpu_custom_call.1} parent=1 // pred_region
      _
    $region9: #{tpu_custom_call.1} parent=1 // pred_fallthru
      _
    // Predicated region
    $region10: #{tpu_custom_call.1} parent=1 // pred_check
      _
    $region11: #{tpu_custom_call.1} parent=1 // pred_check_branch
      %20 = sbr.rel (0) target = $region13
    $region12: #{tpu_custom_call.1} parent=1 // pred_region
      _
    $region13: #{tpu_custom_call.1} parent=1 // pred_fallthru
      _
    // Predicated region
    $region14: #{tpu_custom_call.1} parent=1 // pred_check
      _
    $region15: #{tpu_custom_call.1} parent=1 // pred_check_branch
      %22 = sbr.rel (0) target = $region17
    $region16: #{tpu_custom_call.1} parent=1 // pred_region
      _
    $region17: #{tpu_custom_call.1} parent=1 // pred_fallthru
      _
    // Predicated region
    $region18: #{tpu_custom_call.1} parent=1 // pred_check
      _
    $region19: #{tpu_custom_call.1} parent=1 // pred_check_branch
      %24 = sbr.rel (0) target = $region21
    $region20: #{tpu_custom_call.1} parent=1 // pred_region
      _
    $region21: #{tpu_custom_call.1} parent=1 // pred_fallthru
      _
    // Predicated region
    $region22: #{tpu_custom_call.1} parent=1 // pred_check
      _
    $region23: #{tpu_custom_call.1} parent=1 // pred_check_branch
      %26 = sbr.rel (0) target = $region25
    $region24: #{tpu_custom_call.1} parent=1 // pred_region
      _
    $region25: #{tpu_custom_call.1} parent=1 // pred_fallthru
      _
    // Predicated region
    $region26: #{tpu_custom_call.1} parent=1 // pred_check
      _
    $region27: #{tpu_custom_call.1} parent=1 // pred_check_branch
      %28 = sbr.rel (0) target = $region29
    $region28: #{tpu_custom_call.1} parent=1 // pred_region
      _
    $region29: #{tpu_custom_call.1} parent=1 // pred_fallthru
      _
    %v29 = vld [vmem:[%s0] sm:$0x7]
    %v30 = vld [vmem:[%s1] sm:$0xff]
    %v31 = vld [vmem:[%s1 + $0x8] sm:$0xff]
    %v32 = vld [vmem:[%s1 + $0x10] sm:$0xff]
    %v33 = vld [vmem:[%s1 + $0x18] sm:$0xff]
    %v34 = vld [vmem:[%s1 + $0x20] sm:$0xff]
    %v35 = vld [vmem:[%s1 + $0x28] sm:$0xff]
    %v36 = vld [vmem:[%s1 + $0x30] sm:$0xff]
    %v37 = vld [vmem:[%s1 + $0x38] sm:$0xff]
    %v38 = vld [vmem:[%s2] sm:$0xff]
    %v39 = vld [vmem:[%s2 + $0x8] sm:$0xff]
    %v40 = vld [vmem:[%s2 + $0x10] sm:$0xff]
    %v41 = vld [vmem:[%s2 + $0x18] sm:$0xff]
    %v42 = vld [vmem:[%s2 + $0x20] sm:$0xff]
    %v43 = vld [vmem:[%s2 + $0x28] sm:$0xff]
    %v44 = vld [vmem:[%s2 + $0x30] sm:$0xff]
    %v45 = vld [vmem:[%s2 + $0x38] sm:$0xff]
    %47 = vset.pattern.permute.xlu0 0
    %48 = vperm.xlu0 %47, %v38
    %v49 = vpop.permute.xlu0 %48
    %52 = vset.pattern.permute.xlu0 0
    %53 = vperm.xlu0 %52, %v39
    %v54 = vpop.permute.xlu0 %53
    %57 = vset.pattern.permute.xlu0 0
    %58 = vperm.xlu0 %57, %v40
    %v59 = vpop.permute.xlu0 %58
    %62 = vset.pattern.permute.xlu0 0
    %63 = vperm.xlu0 %62, %v41
    %v64 = vpop.permute.xlu0 %63
    %67 = vset.pattern.permute.xlu0 0
    %68 = vperm.xlu0 %67, %v42
    %v69 = vpop.permute.xlu0 %68
    %72 = vset.pattern.permute.xlu0 0
    %73 = vperm.xlu0 %72, %v43
    %v74 = vpop.permute.xlu0 %73
    %77 = vset.pattern.permute.xlu0 0
    %78 = vperm.xlu0 %77, %v44
    %v79 = vpop.permute.xlu0 %78
    %82 = vset.pattern.permute.xlu0 0
    %83 = vperm.xlu0 %82, %v45
    %v84 = vpop.permute.xlu0 %83
    %vm86 = vcmask 23552
    %v88 = vsel %vm86, %v30, 0
    %v91 = vsel %vm86, %v31, 0
    %v94 = vsel %vm86, %v32, 0
    %v97 = vsel %vm86, %v33, 0
    %v100 = vsel %vm86, %v34, 0
    %v103 = vsel %vm86, %v35, 0
    %v106 = vsel %vm86, %v36, 0
    %v109 = vsel %vm86, %v37, 0
    %vm111 = vcmask 1042432
    %v113 = vsel %vm111, %v29, 0
    %115 = vmatprep.subr.mxu0 0.0
    %116 = vmatpush1.msra.mxu0 0.0
    %117 = vmatprep.subr.mxu0 0.0
    %118 = vmatpush1.msra.mxu0 0.0
    %119 = vmatprep.subr.mxu0 0.0
    %120 = vmatpush1.msra.mxu0 0.0
    %121 = vmatprep.subr.mxu0 0.0
    %122 = vmatpush1.msra.mxu0 0.0
    %123 = vmatprep.subr.mxu0 0.0
    %124 = vmatpush1.msra.mxu0 0.0
    %125 = vmatprep.subr.mxu0 0.0
    %126 = vmatpush1.msra.mxu0 0.0
    %127 = vmatprep.subr.mxu0 0.0
    %128 = vmatpush1.msra.mxu0 0.0
    %129 = vmatprep.subr.mxu0 0.0
    %130 = vmatpush1.msra.mxu0 0.0
    %131 = vmatprep.subr.mxu0 0.0
    %132 = vmatpush1.msra.mxu0 0.0
    %133 = vmatprep.subr.mxu0 0.0
    %134 = vmatpush1.msra.mxu0 0.0
    %135 = vmatprep.subr.mxu0 0.0
    %136 = vmatpush1.msra.mxu0 0.0
    %137 = vmatprep.subr.mxu0 0.0
    %138 = vmatpush1.msra.mxu0 0.0
    %139 = vmatprep.subr.mxu0 0.0
    %140 = vmatpush1.msra.mxu0 0.0
    %141 = vmatprep.subr.mxu0 0.0
    %142 = vmatpush1.msra.mxu0 0.0
    %143 = vmatprep.subr.mxu0 0.0
    %144 = vmatpush1.msra.mxu0 0.0
    %145 = vmatprep.subr.mxu0 0.0
    %146 = vmatpush1.msra.mxu0 %v113
    %147 = vmatprep.subr.mxu0 0.0
    %148 = vmatpush2.msra.mxu0 0.0
    %149 = vmatprep.subr.mxu0 0.0
    %150 = vmatpush2.msra.mxu0 0.0
    %151 = vmatprep.subr.mxu0 0.0
    %152 = vmatpush2.msra.mxu0 0.0
    %153 = vmatprep.subr.mxu0 0.0
    %154 = vmatpush2.msra.mxu0 0.0
    %155 = vmatprep.subr.mxu0 0.0
    %156 = vmatpush2.msra.mxu0 0.0
    %157 = vmatprep.subr.mxu0 0.0
    %158 = vmatpush2.msra.mxu0 0.0
    %159 = vmatprep.subr.mxu0 0.0
    %160 = vmatpush2.msra.mxu0 0.0
    %161 = vmatprep.subr.mxu0 0.0
    %162 = vmatpush2.msra.mxu0 0.0
    %163 = vmatprep.subr.mxu0 0.0
    %164 = vmatpush2.msra.mxu0 0.0
    %165 = vmatprep.subr.mxu0 0.0
    %166 = vmatpush2.msra.mxu0 0.0
    %167 = vmatprep.subr.mxu0 0.0
    %168 = vmatpush2.msra.mxu0 0.0
    %169 = vmatprep.subr.mxu0 0.0
    %170 = vmatpush2.msra.mxu0 0.0
    %171 = vmatprep.subr.mxu0 0.0
    %172 = vmatpush2.msra.mxu0 0.0
    %173 = vmatprep.subr.mxu0 0.0
    %174 = vmatpush2.msra.mxu0 0.0
    %175 = vmatprep.subr.mxu0 0.0
    %176 = vmatpush2.msra.mxu0 0.0
    %177 = vmatprep.subr.mxu0 0.0
    %178 = vmatpush2.msra.mxu0 0.0
    %179 = vmatprep.mubr.f32.mxu0 0.0
    %180 = vmatmul.mubr.f32.gmra.mxu0 %v88
    %v181 = vpop.f32.mrf.mxu0
    %v182 = vadd.f32 %v49, %v181
    %v183 = vpop.f32.mrf.mxu0
    %184 = vmatprep.mubr.f32.mxu0 0.0
    %185 = vmatmul.mubr.f32.gmra.mxu0 %v91
    %v186 = vpop.f32.mrf.mxu0
    %v187 = vadd.f32 %v54, %v186
    %v188 = vpop.f32.mrf.mxu0
    %189 = vmatprep.mubr.f32.mxu0 0.0
    %190 = vmatmul.mubr.f32.gmra.mxu0 %v94
    %v191 = vpop.f32.mrf.mxu0
    %v192 = vadd.f32 %v59, %v191
    %v193 = vpop.f32.mrf.mxu0
    %194 = vmatprep.mubr.f32.mxu0 0.0
    %195 = vmatmul.mubr.f32.gmra.mxu0 %v97
    %v196 = vpop.f32.mrf.mxu0
    %v197 = vadd.f32 %v64, %v196
    %v198 = vpop.f32.mrf.mxu0
    %199 = vmatprep.mubr.f32.mxu0 0.0
    %200 = vmatmul.mubr.f32.gmra.mxu0 %v100
    %v201 = vpop.f32.mrf.mxu0
    %v202 = vadd.f32 %v69, %v201
    %v203 = vpop.f32.mrf.mxu0
    %204 = vmatprep.mubr.f32.mxu0 0.0
    %205 = vmatmul.mubr.f32.gmra.mxu0 %v103
    %v206 = vpop.f32.mrf.mxu0
    %v207 = vadd.f32 %v74, %v206
    %v208 = vpop.f32.mrf.mxu0
    %209 = vmatprep.mubr.f32.mxu0 0.0
    %210 = vmatmul.mubr.f32.gmra.mxu0 %v106
    %v211 = vpop.f32.mrf.mxu0
    %v212 = vadd.f32 %v79, %v211
    %v213 = vpop.f32.mrf.mxu0
    %214 = vmatprep.mubr.f32.mxu0 0.0
    %215 = vmatmul.mubr.f32.gmra.mxu0 %v109
    %v216 = vpop.f32.mrf.mxu0
    %v217 = vadd.f32 %v84, %v216
    %v218 = vpop.f32.mrf.mxu0
    %219 = vdwg.mxu0
    %v220 = vmul.f32 %v182, 0.01
    %v221 = vmul.f32 %v187, 0.01
    %v222 = vmul.f32 %v192, 0.01
    %v223 = vmul.f32 %v197, 0.01
    %v224 = vmul.f32 %v202, 0.01
    %v225 = vmul.f32 %v207, 0.01
    %v226 = vmul.f32 %v212, 0.01
    %v227 = vmul.f32 %v217, 0.01
    %v228 = vmax.f32 %v182, %v220
    %v229 = vmax.f32 %v187, %v221
    %v230 = vmax.f32 %v192, %v222
    %v231 = vmax.f32 %v197, %v223
    %v232 = vmax.f32 %v202, %v224
    %v233 = vmax.f32 %v207, %v225
    %v234 = vmax.f32 %v212, %v226
    %v235 = vmax.f32 %v217, %v227
    %v236 = vld [vmem:[%s3] sm:$0xff]
    %v237 = vld [vmem:[%s4] sm:$0xff]
    %239 = vset.pattern.permute.xlu0 0
    %240 = vperm.xlu0 %239, %v237
    %v241 = vpop.permute.xlu0 %240
    %vm243 = vcmask 523264
    %v245 = vsel %vm243, %v236, 0
    %247 = vmatprep.subr.mxu0 0.0
    %248 = vmatpush1.msra.mxu0 0.0
    %249 = vmatprep.subr.mxu0 0.0
    %250 = vmatpush1.msra.mxu0 0.0
    %251 = vmatprep.subr.mxu0 0.0
    %252 = vmatpush1.msra.mxu0 0.0
    %253 = vmatprep.subr.mxu0 0.0
    %254 = vmatpush1.msra.mxu0 0.0
    %255 = vmatprep.subr.mxu0 0.0
    %256 = vmatpush1.msra.mxu0 0.0
    %257 = vmatprep.subr.mxu0 0.0
    %258 = vmatpush1.msra.mxu0 0.0
    %259 = vmatprep.subr.mxu0 0.0
    %260 = vmatpush1.msra.mxu0 0.0
    %261 = vmatprep.subr.mxu0 0.0
    %262 = vmatpush1.msra.mxu0 0.0
    %263 = vmatprep.subr.mxu0 0.0
    %264 = vmatpush1.msra.mxu0 %v235
    %265 = vmatprep.subr.mxu0 0.0
    %266 = vmatpush1.msra.mxu0 %v234
    %267 = vmatprep.subr.mxu0 0.0
    %268 = vmatpush1.msra.mxu0 %v233
    %269 = vmatprep.subr.mxu0 0.0
    %270 = vmatpush1.msra.mxu0 %v232
    %271 = vmatprep.subr.mxu0 0.0
    %272 = vmatpush1.msra.mxu0 %v231
    %273 = vmatprep.subr.mxu0 0.0
    %274 = vmatpush1.msra.mxu0 %v230
    %275 = vmatprep.subr.mxu0 0.0
    %276 = vmatpush1.msra.mxu0 %v229
    %277 = vmatprep.subr.mxu0 0.0
    %278 = vmatpush1.msra.mxu0 %v228
    %279 = vmatprep.subr.mxu0 0.0
    %280 = vmatpush2.msra.mxu0 0.0
    %281 = vmatprep.subr.mxu0 0.0
    %282 = vmatpush2.msra.mxu0 0.0
    %283 = vmatprep.subr.mxu0 0.0
    %284 = vmatpush2.msra.mxu0 0.0
    %285 = vmatprep.subr.mxu0 0.0
    %286 = vmatpush2.msra.mxu0 0.0
    %287 = vmatprep.subr.mxu0 0.0
    %288 = vmatpush2.msra.mxu0 0.0
    %289 = vmatprep.subr.mxu0 0.0
    %290 = vmatpush2.msra.mxu0 0.0
    %291 = vmatprep.subr.mxu0 0.0
    %292 = vmatpush2.msra.mxu0 0.0
    %293 = vmatprep.subr.mxu0 0.0
    %294 = vmatpush2.msra.mxu0 0.0
    %295 = vmatprep.subr.mxu0 0.0
    %296 = vmatpush2.msra.mxu0 0.0
    %297 = vmatprep.subr.mxu0 0.0
    %298 = vmatpush2.msra.mxu0 0.0
    %299 = vmatprep.subr.mxu0 0.0
    %300 = vmatpush2.msra.mxu0 0.0
    %301 = vmatprep.subr.mxu0 0.0
    %302 = vmatpush2.msra.mxu0 0.0
    %303 = vmatprep.subr.mxu0 0.0
    %304 = vmatpush2.msra.mxu0 0.0
    %305 = vmatprep.subr.mxu0 0.0
    %306 = vmatpush2.msra.mxu0 0.0
    %307 = vmatprep.subr.mxu0 0.0
    %308 = vmatpush2.msra.mxu0 0.0
    %309 = vmatprep.subr.mxu0 0.0
    %310 = vmatpush2.msra.mxu0 0.0
    %311 = vmatprep.mubr.f32.mxu0 0.0
    %312 = vmatmul.mubr.f32.gmra.mxu0 %v245
    %v313 = vpop.f32.mrf.mxu0
    %v314 = vadd.f32 %v241, %v313
    %v315 = vpop.f32.mrf.mxu0
    %316 = vdwg.mxu0
    %v317 = vmul.f32 %v314, 0.01
    %v318 = vmax.f32 %v314, %v317
    %v319 = vld [vmem:[%s5] sm:$0xff]
    %321 = vset.pattern.permute.xlu0 0
    %322 = vperm.xlu0 %321, %v319
    %v323 = vpop.permute.xlu0 %322
    %v325 = vmul.f32 %v323, %v318
    %v326 = vrot.slane %v325, 4
    %v327 = vadd.f32 %v325, %v326
    %v328 = vrot.slane %v327, 2
    %v329 = vadd.f32 %v327, %v328
    %v330 = vrot.slane %v329, 1
    %v331 = vadd.f32 %v329, %v330
    %v332 = vld [vmem:[#allocation2] sm:$0x1]
    %334 = vset.pattern.permute.xlu0 0
    %335 = vperm.xlu0 %334, %v332
    %v336 = vpop.permute.xlu0 %335
    %v338 = vlaneseq
    %v339 = vshrl.u32 %v338, 7
    %v340 = vsub.s32 0, %v339
    %v341 = vrot.slane %v336, %v340
    %v342 = vadd.f32 %v331, %v341
    %343 = vst [vmem:[#allocation3] sm:$0x1] %v342
    // Predicated region
    $region30: #{tpu_custom_call.1} parent=1 // pred_check
      _
    $region31: #{tpu_custom_call.1} parent=1 // pred_check_branch
      %345 = sbr.rel (0) target = $region33
    $region32: #{tpu_custom_call.1} parent=1 // pred_region
      %s347 = ssub.s32 16, 16
      %348 = vsyncadd [#allocation4], %s347
      %s350 = sshll.u32 [#allocation3], 4
      %s351 = int_to_ptr.vmem [resolvable:$true] %s350
      %353 = dma.vmem_to_hbm [thread:$0]  %s351, 16, %s7, [#allocation4]
    $region33: #{tpu_custom_call.1} parent=1 // pred_fallthru
      _
    // Predicated region
    $region34: #{tpu_custom_call.1} parent=1 // pred_check
      _
    $region35: #{tpu_custom_call.1} parent=1 // pred_check_branch
      %355 = sbr.rel (0) target = $region37
    $region36: #{tpu_custom_call.1} parent=1 // pred_region
      %356 = dma.done [#allocation4], 16
    $region37: #{tpu_custom_call.1} parent=1 // pred_fallthru
      _
    %357 = vsyncpa [#allocation4], 1

</llo_original>
